<compile_context>
chip_gen: v5e
topology: v5e:2x2
jax: 0.10.0
libtpu: 0.0.40
codegen_flags: <defaults>
</compile_context>

<pallas_src>
import functools
import math

import numpy as np
import jax
import jax.numpy as jnp
from jax.experimental import pallas as pl
from jax.experimental.pallas import tpu as pltpu


def _pick_tile(dim, align, max_tile):
    """Largest divisor of `dim` that is a multiple of `align` and <= max_tile.
    Falls back to the full dim (always a legal block size)."""
    if dim % align != 0 or dim <= max_tile:
        return dim
    t = (max_tile // align) * align
    while t >= align:
        if dim % t == 0:
            return t
        t -= align
    return dim


# --------------------------------- linear ---------------------------------- #
def _linear_kernel(x_ref, w_ref, b_ref, o_ref, acc_ref):
    # x_ref: (tm, tk) bf16, w_ref: (tk, tn) bf16, b_ref: (1, tn) f32,
    # o_ref: (tm, tn) bf16, acc_ref: (tm, tn) f32, resident across the K axis.
    k = pl.program_id(2)

    @pl.when(k == 0)
    def _():
        acc_ref[...] = jnp.zeros(acc_ref.shape, acc_ref.dtype)

    acc_ref[...] += jnp.dot(x_ref[...], w_ref[...],
                            preferred_element_type=jnp.float32)

    @pl.when(k == pl.num_programs(2) - 1)
    def _():
        o_ref[...] = (acc_ref[...] + b_ref[...]).astype(o_ref.dtype)


def linear(x, w, b_row, *, out_dtype=jnp.bfloat16,
           tm_max=1024, tn_max=1024, tk_max=1024):
    """y = x @ w + b.  x:(M,K) bf16, w:(K,N) bf16, b_row:(1,N) f32."""
    M, K = x.shape
    K2, N = w.shape
    assert K == K2 and b_row.shape == (1, N)

    tm = min(tm_max, M)                     # full-M or 8-multiple; ragged tail OK
    tn = _pick_tile(N, 128, tn_max)         # lane-dense output tiles
    tk = _pick_tile(K, 128, tk_max)
    gm = pl.cdiv(M, tm)
    # v7x megacore: keep at least one parallel grid axis with extent >= 2.
    if gm == 1 and N // tn == 1 and N % 256 == 0:
        tn = N // 2

    return pl.pallas_call(
        _linear_kernel,
        out_shape=jax.ShapeDtypeStruct((M, N), out_dtype),
        grid=(gm, N // tn, K // tk),
        in_specs=[
            pl.BlockSpec((tm, tk), lambda i, j, k: (i, k)),
            pl.BlockSpec((tk, tn), lambda i, j, k: (k, j)),
            pl.BlockSpec((1, tn), lambda i, j, k: (0, j)),
        ],
        out_specs=pl.BlockSpec((tm, tn), lambda i, j, k: (i, j)),
        scratch_shapes=[pltpu.VMEM((tm, tn), jnp.float32)],
        compiler_params=pltpu.CompilerParams(
            dimension_semantics=("parallel", "parallel", "arbitrary"),
            vmem_limit_bytes=40 * 1024 * 1024,
        ),
    )(x, w, b_row)


# ----------------------------- flash attention ----------------------------- #
def _flash_attn_kernel(q_ref, k_ref, v_ref, o_ref, m_ref, l_ref, acc_ref,
                       *, scale, seq_len, tkv):
    # q_ref: (tq, ht, hs) bf16, k_ref/v_ref: (tkv, ht, hs) bf16,
    # o_ref: (tq, ht, hs) bf16, scratch m/l: (ht, tq, 1) f32, acc: (ht, tq, hs).
    ki = pl.program_id(3)

    @pl.when(ki == 0)
    def _():
        m_ref[...] = jnp.full(m_ref.shape, -jnp.inf, m_ref.dtype)
        l_ref[...] = jnp.zeros(l_ref.shape, l_ref.dtype)
        acc_ref[...] = jnp.zeros(acc_ref.shape, acc_ref.dtype)

    # Head-leading operands so the batched einsums use the canonical
    # batch-first MXU form; 1/sqrt(hs) folded into the small q tile.
    q = pltpu.einshape("qhd->hqd", q_ref[...]) * jnp.asarray(scale, q_ref.dtype)
    k = pltpu.einshape("khd->hkd", k_ref[...])
    v = pltpu.einshape("khd->hkd", v_ref[...])

    s_blk = jnp.einsum("hqd,hkd->hqk", q, k,
                       preferred_element_type=jnp.float32)        # (ht, tq, tkv)

    if seq_len % tkv != 0:  # static: only emitted when the kv tail is ragged
        kv_pos = ki * tkv + jax.lax.broadcasted_iota(jnp.int32, s_blk.shape, 2)
        s_blk = jnp.where(kv_pos < seq_len, s_blk, -jnp.inf)

    m_prev = m_ref[...]
    m_new = jnp.maximum(m_prev, jnp.max(s_blk, axis=-1, keepdims=True))
    alpha = jnp.exp(m_prev - m_new)
    p = jnp.exp(s_blk - m_new)
    l_ref[...] = alpha * l_ref[...] + jnp.sum(p, axis=-1, keepdims=True)
    acc_ref[...] = alpha * acc_ref[...] + jnp.einsum(
        "hqk,hkd->hqd", p.astype(v.dtype), v,
        preferred_element_type=jnp.float32)
    m_ref[...] = m_new

    @pl.when(ki == pl.num_programs(3) - 1)
    def _():
        out = acc_ref[...] * pl.reciprocal(l_ref[...], approx=True)  # EUP slot
        # Single contiguous whole-block store in (s, B, hc, hs) order.
        o_ref[...] = pltpu.einshape("hqd->qhd", out.astype(o_ref.dtype))


def flash_attention(qkv5, *, out_dtype=jnp.bfloat16, tq_max=512, tkv_max=256):
    """Scaled-dot-product attention over the qkv-linear output.

    qkv5: (s, B, 3, hc, hs), q|k|v-contiguous (permuted weight columns), so the
    q/k/v selection and the (s,B,hc,*) <-> per-head views are expressed purely
    via BlockSpec index_maps — no XLA transposes and no in-kernel extraction.
    """
    s, B, three, hc, hs = qkv5.shape
    assert three == 3
    ht = hc if (hc <= 8 or hc % 8 != 0) else 8   # head-chunk per grid step
    tq = min(tq_max, s)
    tkv = min(tkv_max, s)
    grid = (B, hc // ht, pl.cdiv(s, tq), pl.cdiv(s, tkv))

    kern = functools.partial(_flash_attn_kernel, scale=1.0 / math.sqrt(hs),
                             seq_len=s, tkv=tkv)
    return pl.pallas_call(
        kern,
        out_shape=jax.ShapeDtypeStruct((s, B, hc, hs), out_dtype),
        grid=grid,
        in_specs=[
            pl.BlockSpec((tq, None, None, ht, hs),
                         lambda b, c, qi, ki: (qi, b, 0, c, 0)),   # q
            pl.BlockSpec((tkv, None, None, ht, hs),
                         lambda b, c, qi, ki: (ki, b, 1, c, 0)),   # k
            pl.BlockSpec((tkv, None, None, ht, hs),
                         lambda b, c, qi, ki: (ki, b, 2, c, 0)),   # v
        ],
        out_specs=pl.BlockSpec((tq, None, ht, hs),
                               lambda b, c, qi, ki: (qi, b, c, 0)),
        scratch_shapes=[
            pltpu.VMEM((ht, tq, 1), jnp.float32),    # running max
            pltpu.VMEM((ht, tq, 1), jnp.float32),    # running denom
            pltpu.VMEM((ht, tq, hs), jnp.float32),   # output accumulator
        ],
        compiler_params=pltpu.CompilerParams(
            dimension_semantics=("parallel", "parallel", "parallel", "arbitrary"),
            vmem_limit_bytes=40 * 1024 * 1024,
        ),
    )(qkv5, qkv5, qkv5)


# ------------------------------- model glue -------------------------------- #
def init_params(key, emb_dim, num_layers):
    """nn.Linear-style init, f32, weights stored as (in, out)."""
    params = []
    bound = 1.0 / math.sqrt(emb_dim)
    for _ in range(num_layers):
        key, k1, k2, k3, k4 = jax.random.split(key, 5)
        w_qkv = jax.random.uniform(k1, (emb_dim, 3 * emb_dim), jnp.float32, -bound, bound)
        b_qkv = jax.random.uniform(k2, (3 * emb_dim,), jnp.float32, -bound, bound)
        w_out = jax.random.uniform(k3, (emb_dim, emb_dim), jnp.float32, -bound, bound)
        b_out = jax.random.uniform(k4, (emb_dim,), jnp.float32, -bound, bound)
        params.append((w_qkv, b_qkv, w_out, b_out))
    return params


def pack_params(params, hc, hs):
    """One-time repack (outside the forward): bf16 weights, f32 row biases, and
    qkv columns permuted from [head,(q|k|v),feat] to [(q|k|v),head,feat]."""
    emb = hc * hs
    perm = np.arange(3 * emb).reshape(hc, 3, hs).transpose(1, 0, 2).reshape(-1)
    packed = []
    for (w_qkv, b_qkv, w_out, b_out) in params:
        packed.append((
            jnp.asarray(w_qkv[:, perm], jnp.bfloat16),
            jnp.asarray(b_qkv[perm], jnp.float32).reshape(1, -1),
            jnp.asarray(w_out, jnp.bfloat16),
            jnp.asarray(b_out, jnp.float32).reshape(1, -1),
        ))
    return packed


def distributed_transformer_forward(x, packed_params):
    """DistributedTransformer.forward with sp_group=None, comm_only=False."""
    s, B, hc, hs = x.shape
    emb = hc * hs
    h = x.reshape(s * B, emb).astype(jnp.bfloat16)
    for (w_qkv, b_qkv, w_out, b_out) in packed_params:
        qkv = linear(h, w_qkv, b_qkv)                          # (s*B, 3*emb)
        att = flash_attention(qkv.reshape(s, B, 3, hc, hs))    # (s, B, hc, hs)
        h = linear(att.reshape(s * B, emb), w_out, b_out)      # (s*B, emb)
    return h.reshape(s, B, hc, hs).astype(jnp.float32)


def reference_forward(x, params):
    """Pure-JAX reference on the ORIGINAL (unpermuted, f32) params, mirroring
    the kernel precision (bf16 operands, f32 accumulation, q-scaled) but with
    an exact softmax, so the comparison isolates kernel logic."""
    bf = jnp.bfloat16
    s, B, hc, hs = x.shape
    emb = hc * hs
    scale = jnp.asarray(1.0 / math.sqrt(hs), bf)
    h = x.reshape(s, B, emb).astype(bf)
    for (w_qkv, b_qkv, w_out, b_out) in params:
        qkv = (jnp.dot(h, w_qkv.astype(bf), preferred_element_type=jnp.float32)
               + b_qkv).astype(bf)                                        # (s,B,3emb)
        qkv = jnp.transpose(qkv.reshape(s, B, hc, 3 * hs), (1, 2, 0, 3))  # (B,hc,s,3hs)
        q, k, v = jnp.split(qkv, 3, axis=-1)
        scores = jnp.einsum("bhqd,bhkd->bhqk", q * scale, k,
                            preferred_element_type=jnp.float32)
        p = jax.nn.softmax(scores, axis=-1)
        att = jnp.einsum("bhqk,bhkd->bhqd", p.astype(bf), v,
                         preferred_element_type=jnp.float32).astype(bf)
        att = jnp.transpose(att, (2, 0, 1, 3)).reshape(s, B, emb)         # (s,B,emb)
        h = (jnp.dot(att, w_out.astype(bf), preferred_element_type=jnp.float32)
             + b_out).astype(bf)
    return h.reshape(s, B, hc, hs).astype(jnp.float32)


if __name__ == "__main__":
    # Small shapes: seq=8, batch=2, heads=4, head_size=8 -> emb_dim=32, 2 layers.
    s, B, hc, hs = 8, 2, 4, 8
    emb_dim = hc * hs
    num_layers = 2

    key = jax.random.PRNGKey(0)
    key, xk, pk = jax.random.split(key, 3)
    x = jax.random.normal(xk, (s, B, hc, hs), dtype=jnp.float32)
    params = init_params(pk, emb_dim, num_layers)
    packed = pack_params(params, hc, hs)

    out = jax.block_until_ready(distributed_transformer_forward(x, packed))
    ref = reference_forward(x, params)

    assert out.shape == (s, B, hc, hs)
    err = float(jnp.max(jnp.abs(out - ref)))
    assert jnp.allclose(out, ref, atol=2e-2, rtol=2e-2), f"mismatch vs reference: {err}"
    print("KERNEL_OK")
</pallas_src>

<mosaic_0001>
module attributes {stable_mosaic.version = 11 : i64} {
  func.func @_linear_kernel(%arg0: i32, %arg1: i32, %arg2: i32, %arg3: memref<16x32xbf16, #tpu.memory_space<vmem>>, %arg4: memref<32x96xbf16, #tpu.memory_space<vmem>>, %arg5: memref<1x96xf32, #tpu.memory_space<vmem>>, %arg6: memref<16x96xbf16, #tpu.memory_space<vmem>>, %arg7: memref<16x96xf32, #tpu.memory_space<vmem>>) attributes {dimension_semantics = [#tpu.dimension_semantics<parallel>, #tpu.dimension_semantics<parallel>, #tpu.dimension_semantics<arbitrary>], iteration_bounds = array<i64: 1, 1, 1>, scalar_prefetch = 0 : i64, scratch_operands = 1 : i64, tpu.core_type = #tpu.core_type<tc>, window_params = [{transform_indices = @transform_0, window_bounds = array<i64: 16, 32>}, {transform_indices = @transform_1, window_bounds = array<i64: 32, 96>}, {transform_indices = @transform_2, window_bounds = array<i64: 1, 96>}, {transform_indices = @transform_3, window_bounds = array<i64: 16, 96>}]} {
    %c0_i32 = arith.constant 0 : i32
    %0 = arith.cmpi eq, %arg2, %c0_i32 : i32
    %1 = arith.extui %0 : i1 to i32
    %c0_i32_0 = arith.constant 0 : i32
    %2 = arith.cmpi ne, %1, %c0_i32_0 : i32
    scf.if %2 {
      %cst_10 = arith.constant 0.000000e+00 : f32
      %12 = vector.broadcast %cst_10 : f32 to vector<16x96xf32>
      %c0_11 = arith.constant 0 : index
      %c0_12 = arith.constant 0 : index
      %13 = vector.load %arg7[%c0_11, %c0_12] : memref<16x96xf32, #tpu.memory_space<vmem>>, vector<16x96xf32>
      tpu.vector_store %arg7[%c0_11, %c0_12], %12 {strides = array<i32>} : memref<16x96xf32, #tpu.memory_space<vmem>>, vector<16x96xf32>,
    } else {
    }
    %c0 = arith.constant 0 : index
    %c0_1 = arith.constant 0 : index
    %3 = vector.load %arg7[%c0, %c0_1] : memref<16x96xf32, #tpu.memory_space<vmem>>, vector<16x96xf32>
    %c0_2 = arith.constant 0 : index
    %c0_3 = arith.constant 0 : index
    %4 = vector.load %arg3[%c0_2, %c0_3] : memref<16x32xbf16, #tpu.memory_space<vmem>>, vector<16x32xbf16>
    %c0_4 = arith.constant 0 : index
    %c0_5 = arith.constant 0 : index
    %5 = vector.load %arg4[%c0_4, %c0_5] : memref<32x96xbf16, #tpu.memory_space<vmem>>, vector<32x96xbf16>
    %cst = arith.constant dense<0.000000e+00> : vector<16x96xf32>
    %6 = tpu.matmul %4, %5, %cst {dimension_numbers = #tpu.dot_dimension_numbers<[1], [0], [0], [1], [0, 0, 1, 1], [], []>} : vector<16x32xbf16>, vector<32x96xbf16>, vector<16x96xf32> -> vector<16x96xf32>
    %7 = arith.addf %3, %6 : vector<16x96xf32>
    %c0_6 = arith.constant 0 : index
    %c0_7 = arith.constant 0 : index
    %8 = vector.load %arg7[%c0_6, %c0_7] : memref<16x96xf32, #tpu.memory_space<vmem>>, vector<16x96xf32>
    tpu.vector_store %arg7[%c0_6, %c0_7], %7 {strides = array<i32>} : memref<16x96xf32, #tpu.memory_space<vmem>>, vector<16x96xf32>,
    %c0_i32_8 = arith.constant 0 : i32
    %9 = arith.cmpi eq, %arg2, %c0_i32_8 : i32
    %10 = arith.extui %9 : i1 to i32
    %c0_i32_9 = arith.constant 0 : i32
    %11 = arith.cmpi ne, %10, %c0_i32_9 : i32
    scf.if %11 {
      %c0_10 = arith.constant 0 : index
      %c0_11 = arith.constant 0 : index
      %12 = vector.load %arg7[%c0_10, %c0_11] : memref<16x96xf32, #tpu.memory_space<vmem>>, vector<16x96xf32>
      %c0_12 = arith.constant 0 : index
      %c0_13 = arith.constant 0 : index
      %13 = vector.load %arg5[%c0_12, %c0_13] : memref<1x96xf32, #tpu.memory_space<vmem>>, vector<1x96xf32>
      %14 = vector.broadcast %13 : vector<1x96xf32> to vector<16x96xf32>
      %15 = arith.addf %12, %14 : vector<16x96xf32>
      %16 = arith.truncf %15 : vector<16x96xf32> to vector<16x96xbf16>
      %c0_14 = arith.constant 0 : index
      %c0_15 = arith.constant 0 : index
      %17 = vector.load %arg6[%c0_14, %c0_15] : memref<16x96xbf16, #tpu.memory_space<vmem>>, vector<16x96xbf16>
      tpu.vector_store %arg6[%c0_14, %c0_15], %16 {strides = array<i32>} : memref<16x96xbf16, #tpu.memory_space<vmem>>, vector<16x96xbf16>,
    } else {
    }
    return
  }
  func.func @transform_0(%arg0: i32, %arg1: i32, %arg2: i32) -> (i32, i32) {
    %c0_i32 = arith.constant 0 : i32
    return %arg0, %arg2 : i32, i32
  }
  func.func @transform_1(%arg0: i32, %arg1: i32, %arg2: i32) -> (i32, i32) {
    %c0_i32 = arith.constant 0 : i32
    return %arg2, %arg1 : i32, i32
  }
  func.func @transform_2(%arg0: i32, %arg1: i32, %arg2: i32) -> (i32, i32) {
    %c0_i32 = arith.constant 0 : i32
    %c0_i32_0 = arith.constant 0 : i32
    return %c0_i32, %arg1 : i32, i32
  }
  func.func @transform_3(%arg0: i32, %arg1: i32, %arg2: i32) -> (i32, i32) {
    %c0_i32 = arith.constant 0 : i32
    return %arg0, %arg1 : i32, i32
  }
}

</mosaic_0001>

<llo_original>
// kernel: tpu_custom_call.1
$region0: #{tpu_custom_call.1}
  #allocation0 [shape = 'u32[]', space=smem, size = 0x4, offset = 0x4, fixed_abs, tag = 'smem constant byte address 0x4 - core index']
  #allocation1 [shape = 'u32[72,128]{1,0:T(1,128)}', space=vmem, size = 0x9000, scoped, tag = 'internal scratch']
  #allocation2 [shape = 'f32[16,96]{1,0:T(8,128)}', space=vmem, size = 0x2000, scoped, tag = 'scratch operand']
  %s0 = inlined_call_operand.hbm [shape: bf16[16,32], index: 0, kind: input, shape index: {}]
  %s1 = inlined_call_operand.hbm [shape: bf16[32,96], index: 1, kind: input, shape index: {}]
  %s2 = inlined_call_operand.vmem [shape: f32[1,96], index: 2, kind: input, shape index: {}]
  %s3 = inlined_call_operand.hbm [shape: bf16[16,96], index: 3, kind: output, shape index: {}]
  %s4 = sld [smem:[#allocation0]]
  $region38: #{tpu_custom_call.1} parent=0
    _
  %s6 = ssub.s32 1, %s4
  %s7 = scalar_select 0, %s6, %s4
  $region1: #{tpu_custom_call.1} parent=0
    #allocation3 [shape = 'u8[4096]{0}', space=vmem, size = 0x1000, scoped, tag = 'input window, operand 0, single buffered']
    #allocation4 [shape = 's32[1]{0}', space=sflag, size = 0x4, scoped, tag = 'scoped memory for tpu_custom_call.1']
    #allocation5 [shape = 's32[1]{0}', space=sflag, size = 0x4, scoped, tag = 'scoped memory for tpu_custom_call.1']
    #allocation6 [shape = 'u8[8192]{0}', space=vmem, size = 0x2000, scoped, tag = 'input window, operand 1, single buffered']
    #allocation7 [shape = 's32[1]{0}', space=sflag, size = 0x4, scoped, tag = 'scoped memory for tpu_custom_call.1']
    #allocation8 [shape = 'u8[4096]{0}', space=vmem, size = 0x1000, scoped, tag = 'output window, operand 0, single buffered']
    %8 = vsyncpa [#allocation4], 0
    %9 = vsyncpa [#allocation7], 0
    %10 = vsyncpa [#allocation5], 0
    // Predicated region
    $region2: #{tpu_custom_call.1} parent=1 // pred_check
      _
    $region3: #{tpu_custom_call.1} parent=1 // pred_check_branch
      %12 = sbr.rel (0) target = $region5
    $region4: #{tpu_custom_call.1} parent=1 // pred_region
      %14 = vsyncadd [#allocation4], 0
      %s15 = sshll.u32 %s0, 4
      %s16 = int_to_ptr.hbm [resolvable:$true] %s15
      %s17 = sshll.u32 [#allocation3], 4
      %s18 = int_to_ptr.vmem [resolvable:$true] %s17
      %23 = dma.hbm_to_vmem [thread:$0]  %s16, 128, %s18, [#allocation4], 64, 64, 4
    $region5: #{tpu_custom_call.1} parent=1 // pred_fallthru
      _
    // Predicated region
    $region6: #{tpu_custom_call.1} parent=1 // pred_check
      _
    $region7: #{tpu_custom_call.1} parent=1 // pred_check_branch
      %25 = sbr.rel (0) target = $region9
    $region8: #{tpu_custom_call.1} parent=1 // pred_region
      %27 = vsyncadd [#allocation7], 0
      %s28 = sshll.u32 %s1, 4
      %s29 = int_to_ptr.hbm [resolvable:$true] %s28
      %s30 = sshll.u32 [#allocation6], 4
      %s31 = int_to_ptr.vmem [resolvable:$true] %s30
      %36 = dma.hbm_to_vmem [thread:$0]  %s29, 256, %s31, [#allocation7], 64, 64, 4
    $region9: #{tpu_custom_call.1} parent=1 // pred_fallthru
      _
    // Predicated region
    $region10: #{tpu_custom_call.1} parent=1 // pred_check
      _
    $region11: #{tpu_custom_call.1} parent=1 // pred_check_branch
      %38 = sbr.rel (0) target = $region13
    $region12: #{tpu_custom_call.1} parent=1 // pred_region
      _
    $region13: #{tpu_custom_call.1} parent=1 // pred_fallthru
      _
    // Predicated region
    $region14: #{tpu_custom_call.1} parent=1 // pred_check
      _
    $region15: #{tpu_custom_call.1} parent=1 // pred_check_branch
      %40 = sbr.rel (0) target = $region17
    $region16: #{tpu_custom_call.1} parent=1 // pred_region
      %42 = dma.done [#allocation4], 128
    $region17: #{tpu_custom_call.1} parent=1 // pred_fallthru
      _
    // Predicated region
    $region18: #{tpu_custom_call.1} parent=1 // pred_check
      _
    $region19: #{tpu_custom_call.1} parent=1 // pred_check_branch
      %44 = sbr.rel (0) target = $region21
    $region20: #{tpu_custom_call.1} parent=1 // pred_region
      %46 = dma.done [#allocation7], 256
    $region21: #{tpu_custom_call.1} parent=1 // pred_fallthru
      _
    %p48 = scmp.eq.s32.totalorder 0, 0
    // Predicated region
    $region22: #{tpu_custom_call.1} parent=1 // pred_check
      %p49 = pneg %p48
    $region23: #{tpu_custom_call.1} parent=1 // pred_check_branch
      %51 = sbr.rel (%p49) target = $region25
    $region24: #{tpu_custom_call.1} parent=1 // pred_region
      %vm52 = vcmask 785408
      %53 = vst.msk [vmem:[#allocation2] sm:$0xff] %vm52, 0.0
      %54 = vst.msk [vmem:[#allocation2 + $0x8] sm:$0xff] %vm52, 0.0
    $region25: #{tpu_custom_call.1} parent=1 // pred_fallthru
      _
    %v55 = vld [vmem:[#allocation2] sm:$0xff]
    %v56 = vld [vmem:[#allocation2 + $0x8] sm:$0xff]
    %v57 = vld [vmem:[#allocation3] sm:$0xf]
    %v58 = vld [vmem:[#allocation3 + $0x4] sm:$0xf]
    %v59 = vld [vmem:[#allocation6] sm:$0xf]
    %v60 = vld [vmem:[#allocation6 + $0x4] sm:$0xf]
    %v61 = vld [vmem:[#allocation6 + $0x8] sm:$0xf]
    %v62 = vld [vmem:[#allocation6 + $0xc] sm:$0xf]
    %v65 = vunpack.c.l.b16 %v57
    %v66 = vunpack.c.l.b16 %v58
    %v67 = vpack.c.b16 %v66, %v65
    %v72 = vunpack.c.l.b16 %v59
    %v73 = vunpack.c.l.b16 %v60
    %v74 = vunpack.c.l.b16 %v61
    %v75 = vunpack.c.l.b16 %v62
    %v76 = vpack.c.b16 %v73, %v72
    %v77 = vpack.c.b16 %v75, %v74
    %vm80 = vcmask 261120
    %v82 = vsel %vm80, %v67, 0
    %84 = vmatpush.bf16.msra.mxu0 0
    %85 = vmatpush.bf16.msra.mxu0 0
    %86 = vmatpush.bf16.msra.mxu0 0
    %87 = vmatpush.bf16.msra.mxu0 0
    %88 = vmatpush.bf16.msra.mxu0 0
    %89 = vmatpush.bf16.msra.mxu0 0
    %90 = vmatpush.bf16.msra.mxu0 %v77
    %91 = vmatpush.bf16.msra.mxu0 %v76
    %92 = vmatmul.bf16.gmra.mxu0 %v82
    %v93 = vpop.f32.mrf.mxu0
    %v94 = vadd.f32 0.0, %v93
    %v95 = vpop.f32.mrf.mxu0
    %v96 = vadd.f32 0.0, %v95
    %97 = vdwg.mxu0
    %v98 = vadd.f32 %v55, %v94
    %v99 = vadd.f32 %v56, %v96
    %vm100 = vcmask 785408
    %101 = vst.msk [vmem:[#allocation2] sm:$0xff] %vm100, %v98
    %102 = vst.msk [vmem:[#allocation2 + $0x8] sm:$0xff] %vm100, %v99
    // Predicated region
    $region26: #{tpu_custom_call.1} parent=1 // pred_check
      %p103 = pneg %p48
    $region27: #{tpu_custom_call.1} parent=1 // pred_check_branch
      %105 = sbr.rel (%p103) target = $region29
    $region28: #{tpu_custom_call.1} parent=1 // pred_region
      %v106 = vld [vmem:[#allocation2] sm:$0xff]
      %v107 = vld [vmem:[#allocation2 + $0x8] sm:$0xff]
      %v108 = vld [vmem:[%s2] sm:$0x1]
      %v110 = vperm.slane %v108, 0
      %v112 = vadd.f32 %v106, %v110
      %v113 = vadd.f32 %v107, %v110
      %v114 = vpack.c.bf16 %v112, %v112
      %v115 = vpack.c.bf16 %v113, %v113
      %vm116 = vcmask 781312
      %117 = vst.msk [vmem:[#allocation8] sm:$0xf] %vm116, %v114
      %118 = vst.msk [vmem:[#allocation8 + $0x4] sm:$0xf] %vm116, %v115
    $region29: #{tpu_custom_call.1} parent=1 // pred_fallthru
      _
    // Predicated region
    $region30: #{tpu_custom_call.1} parent=1 // pred_check
      _
    $region31: #{tpu_custom_call.1} parent=1 // pred_check_branch
      %120 = sbr.rel (0) target = $region33
    $region32: #{tpu_custom_call.1} parent=1 // pred_region
      %122 = vsyncadd [#allocation5], 0
      %s123 = sshll.u32 [#allocation8], 4
      %s124 = int_to_ptr.vmem [resolvable:$true] %s123
      %s125 = sshll.u32 %s3, 4
      %s126 = int_to_ptr.hbm [resolvable:$true] %s125
      %131 = dma.vmem_to_hbm [thread:$0]  %s124, 128, %s126, [#allocation5], 64, 64, 4
    $region33: #{tpu_custom_call.1} parent=1 // pred_fallthru
      _
    // Predicated region
    $region34: #{tpu_custom_call.1} parent=1 // pred_check
      _
    $region35: #{tpu_custom_call.1} parent=1 // pred_check_branch
      %133 = sbr.rel (0) target = $region37
    $region36: #{tpu_custom_call.1} parent=1 // pred_region
      %135 = dma.done [#allocation5], 128
    $region37: #{tpu_custom_call.1} parent=1 // pred_fallthru
      _
    %136 = vsyncpa [#allocation4], 1
    %137 = vsyncpa [#allocation7], 1
    %138 = vsyncpa [#allocation5], 1

</llo_original>
